<compile_context>
chip_gen: v6e
topology: v6e:2x2x1
jax: 0.10.0
libtpu: 0.0.40
codegen_flags: <defaults>
</compile_context>

<pallas_src>
import functools

import jax
import jax.numpy as jnp
from jax.experimental import pallas as pl
from jax.experimental.pallas import tpu as pltpu

BN_EPS = 1e-5


def _round_up(a, b):
    return (a + b - 1) // b * b


def _build_slab(window, *, k_size, stride, c_in, tile_l):
    """Build the (K*C_in, TILE_L) im2col slab for one tile from a halo'd, aligned window.

    window: (stride*C_in, TILE_L + halo) value with rows ordered phase-major:
            window[p*C_in + c, j] = x[n, c, (tile_start + j)*stride + p]
    Returns slab with slab[k*C_in + c, dl] = x[n, c, (tile_start + dl)*stride + k].
    The shifts are static offsets into the already-resident window (no unaligned ref loads).
    """
    pieces = []
    for k in range(k_size):
        p = k % stride       # stride phase
        q = k // stride      # static column offset within that phase
        pieces.append(window[p * c_in:(p + 1) * c_in, q:q + tile_l])
    return jnp.concatenate(pieces, axis=0)


def _stats_kernel(xc_ref, stats_ref, acc_ref, *, k_size, stride, c_in, tile_l, l_out):
    """Pass 1: accumulate the augmented Gram matrix of the im2col'd input (per batch element).

    xc_ref:    (1, 1, stride*C_in, TILE_L + halo)  halo'd input window for (n, l-tile)
    stats_ref: (1, KC+1, KC+1)   [ [G, s], [s^T, count] ]   with KC = K*C_in
    acc_ref:   (KC+1, KC+1)      VMEM accumulator, flushed once per batch element
    """
    t = pl.program_id(1)

    @pl.when(t == 0)
    def _():
        acc_ref[...] = jnp.zeros_like(acc_ref)

    window = xc_ref[0, 0]                                                  # (PC, WW)
    slab = _build_slab(window, k_size=k_size, stride=stride, c_in=c_in, tile_l=tile_l)
    ones = jnp.ones((1, tile_l), jnp.float32)
    aug = jnp.concatenate([slab, ones], axis=0)                            # (KC+1, TILE_L)

    # Zero the columns past the true L_out (only nontrivial on the final tile); the mask hits
    # the small slab and the squaring is done by the MXU Gram below.
    valid = jax.lax.broadcasted_iota(jnp.int32, aug.shape, 1) < (l_out - t * tile_l)
    aug = jnp.where(valid, aug, 0.0)

    gram = jax.lax.dot_general(aug, aug, (((1,), (1,)), ((), ())),
                               preferred_element_type=jnp.float32)         # (KC+1, KC+1)
    acc_ref[...] += gram

    @pl.when(t == pl.num_programs(1) - 1)
    def _():
        stats_ref[0] = acc_ref[...]


def _conv_bn_relu_kernel(wf_ref, ss_ref, xc_ref, o_ref, *, k_size, stride, c_in, tile_l):
    """Pass 2: fused Conv1d (single MXU matmul) + folded BatchNorm + ReLU on one output tile.

    wf_ref: (C_out_pad, K*C_in)                    flattened weight (resident)
    ss_ref: (C_out_pad, 2)                         per-channel [scale, shift]
    xc_ref: (1, 1, stride*C_in, TILE_L + halo)     halo'd input window
    o_ref:  (1, C_out_pad, TILE_L)                 output tile, already in NCL layout
    """
    window = xc_ref[0, 0]
    slab = _build_slab(window, k_size=k_size, stride=stride, c_in=c_in, tile_l=tile_l)
    y = jnp.dot(wf_ref[...], slab, preferred_element_type=jnp.float32)     # one matmul, depth K*C_in
    scale = ss_ref[:, 0:1]
    shift = ss_ref[:, 1:2]
    o_ref[0] = jnp.maximum(y * scale + shift, 0.0)


def _pick_tile(l_out, c_in, stride, c_out_pad, k_size):
    """Pick TILE_L from an explicit VMEM working-set budget and derive vmem_limit_bytes."""
    max_off = (k_size - 1) // stride
    halo = _round_up(max_off, 128) if max_off > 0 else 0
    pc_pad = _round_up(stride * c_in, 8)
    kc_pad = _round_up(k_size * c_in, 8)

    def footprint(tl):
        ww = tl + halo
        return 4 * (2 * pc_pad * ww                      # halo'd x window, double-buffered
                    + 2 * c_out_pad * tl                 # output tile, double-buffered
                    + 2 * kc_pad * tl                    # slab build (pieces + concat)
                    + c_out_pad * tl                     # y before scale/ReLU
                    + c_out_pad * _round_up(k_size * c_in, 128))   # resident weight (lane padded)

    budget = 40 << 20   # conservative working-set cap: safe on v7x (64 MiB VMEM), plenty on v5e/v6e
    tile_l = 128
    for cand in (256, 512, 1024, 2048):
        if footprint(cand) <= budget:
            tile_l = cand
    tile_l = min(tile_l, _round_up(l_out, 128))
    vmem_limit = int(min(48 << 20, max(32 << 20, 2 * footprint(tile_l))))
    return tile_l, halo, vmem_limit


@functools.partial(jax.jit, static_argnames=("kernel_size", "stride"))
def basic_block_forward(x, conv_w, conv_b, bn_gamma, bn_beta, *, kernel_size, stride=1):
    """Forward pass of BasicBlock: Conv1d -> BatchNorm1d (batch stats) -> ReLU.

    x:        (N, C_in, L)       float32
    conv_w:   (C_out, C_in, K)   float32
    conv_b:   (C_out,)           float32 (unused: BN mean subtraction cancels it exactly)
    bn_gamma: (C_out,)           float32
    bn_beta:  (C_out,)           float32
    returns:  (N, C_out, L_out)  float32
    """
    del conv_b  # mathematically cancelled by the training-mode BatchNorm mean subtraction

    n, c_in, length = x.shape
    c_out = conv_w.shape[0]
    k_size = kernel_size
    l_out = (length - k_size) // stride + 1
    assert l_out > 0, "kernel does not fit in the input length"

    c_out_pad = _round_up(c_out, 8)
    kc = k_size * c_in
    pc = stride * c_in

    tile_l, halo, vmem_limit = _pick_tile(l_out, c_in, stride, c_out_pad, k_size)
    l_pad = _round_up(l_out, tile_l)
    num_lt = l_pad // tile_l
    ww = tile_l + halo
    j_need = l_pad + halo

    # ---- stride-phase re-layout + non-overlapping halo'd chunks (pure layout, bounded dup) ----
    # x_ph[n, p*C_in + c, j] = x[n, c, j*stride + p]
    need_len = j_need * stride
    if need_len >= length:
        x_t = jnp.pad(x, ((0, 0), (0, 0), (0, need_len - length)))
    else:
        x_t = x[:, :, :need_len]   # trailing elements are never used by any valid output column
    x_ph = jnp.transpose(x_t.reshape(n, c_in, j_need, stride), (0, 3, 1, 2)).reshape(n, pc, j_need)
    if num_lt == 1:
        x_chunks = x_ph[:, None, :, :]                                     # (n, 1, pc, ww)
    else:
        x_chunks = jnp.stack(
            [jax.lax.slice_in_dim(x_ph, t * tile_l, t * tile_l + ww, axis=2)
             for t in range(num_lt)],
            axis=1)                                                        # (n, num_lt, pc, ww)

    # Weight as a single (C_out_pad, K*C_in) matrix; W_flat[o, k*C_in + c] = W[o, c, k]
    w_flat = jnp.transpose(conv_w, (0, 2, 1)).reshape(c_out, kc)
    w_flat_pad = jnp.pad(w_flat, ((0, c_out_pad - c_out), (0, 0)))

    # ---- pass 1: per-n augmented Gram [G, s; s^T, count] of the im2col'd input ----
    stats_kernel = functools.partial(_stats_kernel, k_size=k_size, stride=stride,
                                     c_in=c_in, tile_l=tile_l, l_out=l_out)
    stats = pl.pallas_call(
        stats_kernel,
        out_shape=jax.ShapeDtypeStruct((n, kc + 1, kc + 1), jnp.float32),
        grid=(n, num_lt),
        in_specs=[pl.BlockSpec((1, 1, pc, ww), lambda i, j: (i, j, 0, 0))],
        out_specs=pl.BlockSpec((1, kc + 1, kc + 1), lambda i, j: (i, 0, 0)),
        scratch_shapes=[pltpu.VMEM((kc + 1, kc + 1), jnp.float32)],
        compiler_params=pltpu.CompilerParams(
            dimension_semantics=("parallel", "arbitrary"),
            vmem_limit_bytes=vmem_limit,
        ),
    )(x_chunks)

    # ---- fold BN (training-mode batch stats) analytically into per-channel scale/shift ----
    m_count = n * l_out
    totals = jnp.sum(stats, axis=0)                     # (kc+1, kc+1)
    gram = totals[:kc, :kc]
    s_vec = totals[:kc, kc]
    hi = jax.lax.Precision.HIGHEST
    mean = jnp.matmul(w_flat, s_vec, precision=hi) / m_count                          # (c_out,)
    ey2 = jnp.sum(jnp.matmul(w_flat, gram, precision=hi) * w_flat, axis=1) / m_count  # (c_out,)
    var = jnp.maximum(ey2 - mean * mean, 0.0)           # biased variance, as PyTorch normalizes with
    scale = bn_gamma * jax.lax.rsqrt(var + BN_EPS)
    shift = bn_beta - mean * scale
    ss = jnp.stack([jnp.pad(scale, (0, c_out_pad - c_out)),
                    jnp.pad(shift, (0, c_out_pad - c_out))], axis=1)                  # (c_out_pad, 2)

    # ---- pass 2: fused conv + BN + ReLU; fully parallel grid; lane-dense NCL output ----
    conv_kernel = functools.partial(_conv_bn_relu_kernel, k_size=k_size, stride=stride,
                                    c_in=c_in, tile_l=tile_l)
    out_pad = pl.pallas_call(
        conv_kernel,
        out_shape=jax.ShapeDtypeStruct((n, c_out_pad, l_pad), jnp.float32),
        grid=(n, num_lt),
        in_specs=[
            pl.BlockSpec((c_out_pad, kc), lambda i, j: (0, 0)),
            pl.BlockSpec((c_out_pad, 2), lambda i, j: (0, 0)),
            pl.BlockSpec((1, 1, pc, ww), lambda i, j: (i, j, 0, 0)),
        ],
        out_specs=pl.BlockSpec((1, c_out_pad, tile_l), lambda i, j: (i, 0, j)),
        compiler_params=pltpu.CompilerParams(
            dimension_semantics=("parallel", "parallel"),
            vmem_limit_bytes=vmem_limit,
        ),
    )(w_flat_pad, ss, x_chunks)

    # Output already in (N, C_out, L_out) layout; just strip the alignment padding.
    return out_pad[:, :c_out, :l_out]


if __name__ == "__main__":
    # Small shapes consistent with the module: Conv1d(in_dim=4, out_dim=8, K=3, stride=1)
    N, C_IN, L = 2, 4, 16
    C_OUT, K, STRIDE = 8, 3, 1

    key = jax.random.PRNGKey(0)
    kx, kw, kb, kg, kbe = jax.random.split(key, 5)

    x = jax.random.normal(kx, (N, C_IN, L), dtype=jnp.float32)

    fan_in = C_IN * K
    bound = 1.0 / (fan_in ** 0.5)
    conv_w = jax.random.uniform(kw, (C_OUT, C_IN, K), jnp.float32, -bound, bound)
    conv_b = jax.random.uniform(kb, (C_OUT,), jnp.float32, -bound, bound)
    bn_gamma = 1.0 + 0.1 * jax.random.normal(kg, (C_OUT,), jnp.float32)
    bn_beta = 0.1 * jax.random.normal(kbe, (C_OUT,), jnp.float32)

    out = basic_block_forward(
        x, conv_w, conv_b, bn_gamma, bn_beta, kernel_size=K, stride=STRIDE
    )
    out = jax.block_until_ready(out)

    # Pure-JAX reference of the PyTorch module (conv WITH bias; BN cancels the bias exactly).
    l_out = (L - K) // STRIDE + 1
    cols = jnp.stack(
        [x[:, :, k0: k0 + STRIDE * (l_out - 1) + 1: STRIDE] for k0 in range(K)], axis=3
    )  # (N, C_in, L_out, K)
    y = jnp.einsum("nclk,ock->nol", cols, conv_w) + conv_b[None, :, None]
    mu = y.mean(axis=(0, 2), keepdims=True)
    var = ((y - mu) ** 2).mean(axis=(0, 2), keepdims=True)
    ref = jnp.maximum(
        bn_gamma[None, :, None] * (y - mu) * jax.lax.rsqrt(var + BN_EPS)
        + bn_beta[None, :, None],
        0.0,
    )

    assert out.shape == (N, C_OUT, l_out), out.shape
    assert bool(jnp.all(jnp.isfinite(out)))
    max_err = float(jnp.max(jnp.abs(out - ref)))
    assert max_err < 2e-4, max_err

    print("KERNEL_OK")
</pallas_src>

<mosaic_0001>
module attributes {stable_mosaic.version = 11 : i64} {
  func.func @_stats_kernel(%arg0: i32, %arg1: i32, %arg2: memref<1x1x4x256xf32, #tpu.memory_space<vmem>>, %arg3: memref<1x13x13xf32, #tpu.memory_space<vmem>>, %arg4: memref<13x13xf32, #tpu.memory_space<vmem>>) attributes {dimension_semantics = [#tpu.dimension_semantics<parallel>, #tpu.dimension_semantics<arbitrary>], iteration_bounds = array<i64: 2, 1>, scalar_prefetch = 0 : i64, scratch_operands = 1 : i64, tpu.core_type = #tpu.core_type<tc>, window_params = [{transform_indices = @transform_0, window_bounds = array<i64: 1, 1, 4, 256>}, {transform_indices = @transform_1, window_bounds = array<i64: 1, 13, 13>}]} {
    %c0_i32 = arith.constant 0 : i32
    %0 = arith.cmpi eq, %arg1, %c0_i32 : i32
    %1 = arith.extui %0 : i1 to i32
    %c0_i32_0 = arith.constant 0 : i32
    %2 = arith.cmpi ne, %1, %c0_i32_0 : i32
    scf.if %2 {
      %cst_12 = arith.constant 0.000000e+00 : f32
      %25 = vector.broadcast %cst_12 : f32 to vector<13x13xf32>
      %c0_13 = arith.constant 0 : index
      %c0_14 = arith.constant 0 : index
      %26 = vector.load %arg4[%c0_13, %c0_14] : memref<13x13xf32, #tpu.memory_space<vmem>>, vector<13x13xf32>
      tpu.vector_store %arg4[%c0_13, %c0_14], %25 {strides = array<i32>} : memref<13x13xf32, #tpu.memory_space<vmem>>, vector<13x13xf32>,
    } else {
    }
    %c0 = arith.constant 0 : index
    %c0_1 = arith.constant 0 : index
    %c0_2 = arith.constant 0 : index
    %c0_3 = arith.constant 0 : index
    %3 = vector.load %arg2[%c0, %c0_1, %c0_2, %c0_3] : memref<1x1x4x256xf32, #tpu.memory_space<vmem>>, vector<1x1x4x256xf32>
    %4 = vector.shape_cast %3 : vector<1x1x4x256xf32> to vector<4x256xf32>
    %5 = vector.extract_strided_slice %4 {offsets = [0, 0], sizes = [4, 128], strides = [1, 1]} : vector<4x256xf32> to vector<4x128xf32>
    %6 = vector.extract_strided_slice %4 {offsets = [0, 1], sizes = [4, 128], strides = [1, 1]} : vector<4x256xf32> to vector<4x128xf32>
    %7 = vector.extract_strided_slice %4 {offsets = [0, 2], sizes = [4, 128], strides = [1, 1]} : vector<4x256xf32> to vector<4x128xf32>
    %8 = tpu.concatenate %5, %6, %7 in 0 : vector<4x128xf32>, vector<4x128xf32>, vector<4x128xf32> -> vector<12x128xf32>
    %cst = arith.constant 1.000000e+00 : f32
    %9 = vector.broadcast %cst : f32 to vector<1x128xf32>
    %10 = tpu.concatenate %8, %9 in 0 : vector<12x128xf32>, vector<1x128xf32> -> vector<13x128xf32>
    %11 = tpu.iota {dimensions = array<i32: 1>} : vector<13x128xi32>
    %c128_i32 = arith.constant 128 : i32
    %12 = arith.muli %arg1, %c128_i32 : i32
    %c14_i32 = arith.constant 14 : i32
    %13 = arith.subi %c14_i32, %12 : i32
    %14 = vector.broadcast %13 : i32 to vector<13x128xi32>
    %15 = arith.cmpi slt, %11, %14 : vector<13x128xi32>
    %cst_4 = arith.constant 0.000000e+00 : f32
    %16 = vector.broadcast %cst_4 : f32 to vector<13x128xf32>
    %17 = arith.select %15, %10, %16 : vector<13x128xi1>, vector<13x128xf32>
    %cst_5 = arith.constant dense<0.000000e+00> : vector<13x13xf32>
    %18 = tpu.matmul %17, %17, %cst_5 {dimension_numbers = #tpu.dot_dimension_numbers<[1], [1], [0], [0], [0, 0, 1, 0], [], []>} : vector<13x128xf32>, vector<13x128xf32>, vector<13x13xf32> -> vector<13x13xf32>
    %c0_6 = arith.constant 0 : index
    %c0_7 = arith.constant 0 : index
    %19 = vector.load %arg4[%c0_6, %c0_7] : memref<13x13xf32, #tpu.memory_space<vmem>>, vector<13x13xf32>
    %20 = arith.addf %19, %18 : vector<13x13xf32>
    %c0_8 = arith.constant 0 : index
    %c0_9 = arith.constant 0 : index
    %21 = vector.load %arg4[%c0_8, %c0_9] : memref<13x13xf32, #tpu.memory_space<vmem>>, vector<13x13xf32>
    tpu.vector_store %arg4[%c0_8, %c0_9], %20 {strides = array<i32>} : memref<13x13xf32, #tpu.memory_space<vmem>>, vector<13x13xf32>,
    %c0_i32_10 = arith.constant 0 : i32
    %22 = arith.cmpi eq, %arg1, %c0_i32_10 : i32
    %23 = arith.extui %22 : i1 to i32
    %c0_i32_11 = arith.constant 0 : i32
    %24 = arith.cmpi ne, %23, %c0_i32_11 : i32
    scf.if %24 {
      %c0_12 = arith.constant 0 : index
      %c0_13 = arith.constant 0 : index
      %25 = vector.load %arg4[%c0_12, %c0_13] : memref<13x13xf32, #tpu.memory_space<vmem>>, vector<13x13xf32>
      %c0_14 = arith.constant 0 : index
      %c0_15 = arith.constant 0 : index
      %c0_16 = arith.constant 0 : index
      %26 = vector.load %arg3[%c0_14, %c0_15, %c0_16] : memref<1x13x13xf32, #tpu.memory_space<vmem>>, vector<1x13x13xf32>
      %27 = vector.shape_cast %26 : vector<1x13x13xf32> to vector<13x13xf32>
      %28 = vector.shape_cast %25 : vector<13x13xf32> to vector<1x13x13xf32>
      tpu.vector_store %arg3[%c0_14, %c0_15, %c0_16], %28 {strides = array<i32>} : memref<1x13x13xf32, #tpu.memory_space<vmem>>, vector<1x13x13xf32>,
    } else {
    }
    return
  }
  func.func @transform_0(%arg0: i32, %arg1: i32) -> (i32, i32, i32, i32) {
    %c0_i32 = arith.constant 0 : i32
    %c0_i32_0 = arith.constant 0 : i32
    %c0_i32_1 = arith.constant 0 : i32
    return %arg0, %arg1, %c0_i32, %c0_i32_0 : i32, i32, i32, i32
  }
  func.func @transform_1(%arg0: i32, %arg1: i32) -> (i32, i32, i32) {
    %c0_i32 = arith.constant 0 : i32
    %c0_i32_0 = arith.constant 0 : i32
    %c0_i32_1 = arith.constant 0 : i32
    return %arg0, %c0_i32, %c0_i32_0 : i32, i32, i32
  }
}

module attributes {stable_mosaic.version = 11 : i64} {
  func.func @_conv_bn_relu_kernel(%arg0: i32, %arg1: i32, %arg2: memref<8x12xf32, #tpu.memory_space<vmem>>, %arg3: memref<8x2xf32, #tpu.memory_space<vmem>>, %arg4: memref<1x1x4x256xf32, #tpu.memory_space<vmem>>, %arg5: memref<1x8x128xf32, #tpu.memory_space<vmem>>) attributes {dimension_semantics = [#tpu.dimension_semantics<parallel>, #tpu.dimension_semantics<parallel>], iteration_bounds = array<i64: 2, 1>, scalar_prefetch = 0 : i64, scratch_operands = 0 : i64, tpu.core_type = #tpu.core_type<tc>, window_params = [{pipeline_mode = #tpu.pipeline_mode<synchronous>, transform_indices = @transform_0, window_bounds = array<i64: 8, 12>}, {pipeline_mode = #tpu.pipeline_mode<synchronous>, transform_indices = @transform_1, window_bounds = array<i64: 8, 2>}, {transform_indices = @transform_2, window_bounds = array<i64: 1, 1, 4, 256>}, {transform_indices = @transform_3, window_bounds = array<i64: 1, 8, 128>}]} {
    %c0 = arith.constant 0 : index
    %c0_0 = arith.constant 0 : index
    %c0_1 = arith.constant 0 : index
    %c0_2 = arith.constant 0 : index
    %0 = vector.load %arg4[%c0, %c0_0, %c0_1, %c0_2] : memref<1x1x4x256xf32, #tpu.memory_space<vmem>>, vector<1x1x4x256xf32>
    %1 = vector.shape_cast %0 : vector<1x1x4x256xf32> to vector<4x256xf32>
    %2 = vector.extract_strided_slice %1 {offsets = [0, 0], sizes = [4, 128], strides = [1, 1]} : vector<4x256xf32> to vector<4x128xf32>
    %3 = vector.extract_strided_slice %1 {offsets = [0, 1], sizes = [4, 128], strides = [1, 1]} : vector<4x256xf32> to vector<4x128xf32>
    %4 = vector.extract_strided_slice %1 {offsets = [0, 2], sizes = [4, 128], strides = [1, 1]} : vector<4x256xf32> to vector<4x128xf32>
    %5 = tpu.concatenate %2, %3, %4 in 0 : vector<4x128xf32>, vector<4x128xf32>, vector<4x128xf32> -> vector<12x128xf32>
    %c0_3 = arith.constant 0 : index
    %c0_4 = arith.constant 0 : index
    %6 = vector.load %arg2[%c0_3, %c0_4] : memref<8x12xf32, #tpu.memory_space<vmem>>, vector<8x12xf32>
    %cst = arith.constant dense<0.000000e+00> : vector<8x128xf32>
    %7 = tpu.matmul %6, %5, %cst {dimension_numbers = #tpu.dot_dimension_numbers<[1], [0], [0], [1], [0, 0, 1, 1], [], []>} : vector<8x12xf32>, vector<12x128xf32>, vector<8x128xf32> -> vector<8x128xf32>
    %c0_5 = arith.constant 0 : index
    %c0_6 = arith.constant 0 : index
    %8 = vector.load %arg3[%c0_5, %c0_6] : memref<8x2xf32, #tpu.memory_space<vmem>>, vector<8x1xf32>
    %c0_7 = arith.constant 0 : index
    %c1 = arith.constant 1 : index
    %9 = vector.load %arg3[%c0_7, %c1] : memref<8x2xf32, #tpu.memory_space<vmem>>, vector<8x1xf32>
    %10 = vector.broadcast %8 : vector<8x1xf32> to vector<8x128xf32>
    %11 = arith.mulf %7, %10 : vector<8x128xf32>
    %12 = vector.broadcast %9 : vector<8x1xf32> to vector<8x128xf32>
    %13 = arith.addf %11, %12 : vector<8x128xf32>
    %cst_8 = arith.constant 0.000000e+00 : f32
    %14 = vector.broadcast %cst_8 : f32 to vector<8x128xf32>
    %15 = arith.maximumf %13, %14 : vector<8x128xf32>
    %c0_9 = arith.constant 0 : index
    %c0_10 = arith.constant 0 : index
    %c0_11 = arith.constant 0 : index
    %16 = vector.load %arg5[%c0_9, %c0_10, %c0_11] : memref<1x8x128xf32, #tpu.memory_space<vmem>>, vector<1x8x128xf32>
    %17 = vector.shape_cast %16 : vector<1x8x128xf32> to vector<8x128xf32>
    %18 = vector.shape_cast %15 : vector<8x128xf32> to vector<1x8x128xf32>
    tpu.vector_store %arg5[%c0_9, %c0_10, %c0_11], %18 {strides = array<i32>} : memref<1x8x128xf32, #tpu.memory_space<vmem>>, vector<1x8x128xf32>,
    return
  }
  func.func @transform_0(%arg0: i32, %arg1: i32) -> (i32, i32) {
    %c0_i32 = arith.constant 0 : i32
    %c0_i32_0 = arith.constant 0 : i32
    %c0_i32_1 = arith.constant 0 : i32
    return %c0_i32, %c0_i32_0 : i32, i32
  }
  func.func @transform_1(%arg0: i32, %arg1: i32) -> (i32, i32) {
    %c0_i32 = arith.constant 0 : i32
    %c0_i32_0 = arith.constant 0 : i32
    %c0_i32_1 = arith.constant 0 : i32
    return %c0_i32, %c0_i32_0 : i32, i32
  }
  func.func @transform_2(%arg0: i32, %arg1: i32) -> (i32, i32, i32, i32) {
    %c0_i32 = arith.constant 0 : i32
    %c0_i32_0 = arith.constant 0 : i32
    %c0_i32_1 = arith.constant 0 : i32
    return %arg0, %arg1, %c0_i32, %c0_i32_0 : i32, i32, i32, i32
  }
  func.func @transform_3(%arg0: i32, %arg1: i32) -> (i32, i32, i32) {
    %c0_i32 = arith.constant 0 : i32
    %c0_i32_0 = arith.constant 0 : i32
    return %arg0, %c0_i32, %arg1 : i32, i32, i32
  }
}

</mosaic_0001>

<llo_original>
// kernel: basic_block_forward.2
$region0: #{basic_block_forward.2}
  #allocation0 [shape = 'u32[]', space=smem, size = 0x4, offset = 0x4, fixed_abs, tag = 'smem constant byte address 0x4 - core index']
  #allocation1 [shape = 'u32[144,128]{1,0:T(1,128)}', space=vmem, size = 0x12000, scoped, tag = 'internal scratch']
  #allocation2 [shape = 'f32[13,13]{1,0:T(8,128)}', space=vmem, size = 0x2000, scoped, tag = 'scratch operand']
  %s0 = inlined_call_operand.vmem [shape: f32[2,1,4,256], index: 0, kind: input, shape index: {}]
  %s1 = inlined_call_operand.vmem [shape: f32[2,13,13], index: 1, kind: output, shape index: {}]
  %s2 = sld [smem:[#allocation0]]
  $region45: #{basic_block_forward.2} parent=0
    _
  %s4 = ssub.s32 1, %s2
  %s5 = scalar_select 0, %s4, %s2
  loop: start=0, step=1, limit=4
  $region2: #{basic_block_forward.2} parent=0 // loop_pre_header
    _
  $region3: #{basic_block_forward.2} parent=0 // loop_header
    %s7 = sphi 0, %s11
    %p8 = scmp.ge.s32.totalorder %s7, 4
    %s14 = sphi 0, %s26
    %s15 = sphi 0, %s22
    %s16 = sphi 0, %s14
    %s17 = sphi 0, %s15
    %s18 = sphi 0, %s16
    %s19 = sphi 0, %s17
    %s31 = sphi 0, %s33
    %s34 = sphi 0, %s31
    %s35 = sphi 0, %s34
    %s51 = sphi 0, %s35
    %s57 = sphi 0, %s59
    %s60 = sphi 0, %s57
    %s61 = sphi 0, %s60
    %s77 = sphi 0, %s61
  $region4: #{basic_block_forward.2} parent=0 // loop_header_branch
    %10 = sbr.rel (%p8) target = $region8
  $region5: #{basic_block_forward.2} parent=0 // loop_body
    %s12 = ssub.s32 %s7, 1
    %s13 = ssub.s32 %s7, 2
    %s20 = sadd.s32 1, %s15
    %p21 = scmp.ge.s32.totalorder %s20, 1
    %s22 = scalar_select %p21, 0, %s20
    %s23 = sadd.s32 1, %s14
    %s24 = scalar_select %p21, %s23, %s14
    %p25 = scmp.ge.s32.totalorder %s24, 2
    %s26 = scalar_select %p25, 0, %s24
    %s27 = ssub.s32 %s14, %s26
    %s28 = ssub.s32 %s15, %s22
    %s29 = sor.u32 %s27, %s28
    %p30 = scmp.eq.s32.totalorder %s29, 0
    %s32 = sadd.s32 %s31, 1
    %s33 = scalar_select %p30, %s31, %s32
    %p36 = pneg %p30
    %p37 = scmp.eq.s32.totalorder %s7, 1
    %p38 = por %p36, %p37
    %p39 = scmp.ne.s32.totalorder %s31, %s34
    %p40 = scmp.eq.s32.totalorder %s7, 0
    %p41 = por %p39, %p40
    %p42 = scmp.ne.s32.totalorder %s31, %s34
    %p43 = scmp.eq.s32.totalorder %s12, 1
    %p44 = por %p42, %p43
    %p45 = scmp.ne.s32.totalorder %s34, %s35
    %p46 = scmp.eq.s32.totalorder %s12, 0
    %p47 = por %p45, %p46
    %p48 = scmp.ne.s32.totalorder %s34, %s35
    %p49 = scmp.eq.s32.totalorder %s13, 1
    %p50 = por %p48, %p49
    %p52 = scmp.ne.s32.totalorder %s35, %s51
    %p53 = scmp.eq.s32.totalorder %s13, 0
    %p54 = por %p52, %p53
    %s55 = ssub.s32 %s14, %s26
    %p56 = scmp.eq.s32.totalorder %s55, 0
    %s58 = sadd.s32 %s57, 1
    %s59 = scalar_select %p56, %s57, %s58
    %p62 = pneg %p56
    %p63 = scmp.eq.s32.totalorder %s7, 1
    %p64 = por %p62, %p63
    %p65 = scmp.ne.s32.totalorder %s57, %s60
    %p66 = scmp.eq.s32.totalorder %s7, 0
    %p67 = por %p65, %p66
    %p68 = scmp.ne.s32.totalorder %s57, %s60
    %p69 = scmp.eq.s32.totalorder %s12, 1
    %p70 = por %p68, %p69
    %p71 = scmp.ne.s32.totalorder %s60, %s61
    %p72 = scmp.eq.s32.totalorder %s12, 0
    %p73 = por %p71, %p72
    %p74 = scmp.ne.s32.totalorder %s60, %s61
    %p75 = scmp.eq.s32.totalorder %s13, 1
    %p76 = por %p74, %p75
    %p78 = scmp.ne.s32.totalorder %s61, %s77
    %p79 = scmp.eq.s32.totalorder %s13, 0
    %p80 = por %p78, %p79
    %p81 = scmp.le.s32.totalorder 1, %s7
    %p82 = scmp.lt.s32.totalorder %s7, 3
    %p83 = pnand %p81, %p82
    %p84 = pneg %p83
    // Predicated region
    $region9: #{basic_block_forward.2} parent=5 // pred_check
      _
    $region10: #{basic_block_forward.2} parent=5 // pred_check_branch
      %86 = sbr.rel (%p83) target = $region12
    $region11: #{basic_block_forward.2} parent=5 // pred_region
      %s87 = ssub.s32 %s7, 1
    $region12: #{basic_block_forward.2} parent=5 // pred_fallthru
      _
    %p88 = scmp.lt.s32.totalorder %s7, 2
    // Predicated region
    $region13: #{basic_block_forward.2} parent=5 // pred_check
      %p89 = pneg %p88
    $region14: #{basic_block_forward.2} parent=5 // pred_check_branch
      %91 = sbr.rel (%p89) target = $region16
    $region15: #{basic_block_forward.2} parent=5 // pred_region
      // Predicated region
      $region17: #{basic_block_forward.2} parent=15 // pred_check
        %p92 = pneg %p41
      $region18: #{basic_block_forward.2} parent=15 // pred_check_branch
        %94 = sbr.rel (%p92) target = $region20
      $region19: #{basic_block_forward.2} parent=15 // pred_region
        %p95 = scmp.lt.s32.totalorder %s14, 1
        %s96 = scalar_select %p95, %s14, 1
        %p97 = scmp.lt.s32.totalorder %s15, 0
        %s98 = scalar_select %p97, %s15, 0
        %s99 = smul.addr %s98, 2
        %s100 = smul.addr %s96, 2
        %s101 = sadd.s32 %s99, %s100
        %s102 = smul.addr %s101, 4
        %s103 = scalar_lea.vmem %s0, %s102
      $region20: #{basic_block_forward.2} parent=15 // pred_fallthru
        _
    $region16: #{basic_block_forward.2} parent=5 // pred_fallthru
      _
    %p104 = scmp.le.s32.totalorder 1, %s7
    %p105 = scmp.lt.s32.totalorder %s7, 3
    %p106 = pnand %p104, %p105
    %p107 = pneg %p106
    // Predicated region
    $region21: #{basic_block_forward.2} parent=5 // pred_check
      _
    $region22: #{basic_block_forward.2} parent=5 // pred_check_branch
      %109 = sbr.rel (%p106) target = $region24
    $region23: #{basic_block_forward.2} parent=5 // pred_region
      %s110 = ssub.s32 %s7, 1
      %p111 = scmp.lt.s32.totalorder %s16, 1
      %s112 = scalar_select %p111, %s16, 1
      %p113 = scmp.lt.s32.totalorder %s17, 0
      %s114 = scalar_select %p113, %s17, 0
      %s115 = smul.addr %s114, 2
      %s116 = smul.addr %s112, 2
      %s117 = sadd.s32 %s115, %s116
      %s118 = smul.addr %s117, 4
      %s119 = scalar_lea.vmem %s0, %s118
      %p120 = pneg %p47
      %p121 = pneg %p44
      %p122 = pneg %p73
      %p123 = pneg %p70
      %p124 = scmp.lt.s32.totalorder %s16, 1
      %s125 = scalar_select %p124, %s16, 1
      %s126 = smul.addr %s125, 2
      %s127 = smul.addr %s126, 8
      %s128 = scalar_lea.vmem %s1, %s127
      %p129 = scmp.lt.s32.totalorder %s16, 1
      %s130 = scalar_select %p129, %s16, 1
      %p131 = scmp.lt.s32.totalorder %s17, 0
      %s132 = scalar_select %p131, %s17, 0
      %s133 = smul.addr %s132, 2
      %s134 = smul.addr %s130, 2
      %s135 = sadd.s32 %s133, %s134
      %s136 = smul.addr %s135, 4
      %s137 = scalar_lea.vmem %s0, %s136
      %p138 = scmp.lt.s32.totalorder %s16, 1
      %s139 = scalar_select %p138, %s16, 1
      %s140 = smul.addr %s139, 2
      %s141 = smul.addr %s140, 8
      %s142 = scalar_lea.vmem %s1, %s141
      %p143 = scmp.eq.s32.totalorder %s17, 0
      // Predicated region
      $region25: #{basic_block_forward.2} parent=23 // pred_check
        %p144 = pneg %p143
      $region26: #{basic_block_forward.2} parent=23 // pred_check_branch
        %146 = sbr.rel (%p144) target = $region28
      $region27: #{basic_block_forward.2} parent=23 // pred_region
        %vm147 = vcmask 105472
        %148 = vst.msk [vmem:[#allocation2] sm:$0xff] %vm147, 0.0
        %vm149 = vcmask 102400
        %150 = vst.msk [vmem:[#allocation2 + $0x8] sm:$0x1f] %vm149, 0.0
      $region28: #{basic_block_forward.2} parent=23 // pred_fallthru
        _
      %v151 = vld [vmem:[%s137] sm:$0xff]
      %v153 = vcombine.low %v151, %v151
      %154 = vrot.lane.b32.xlu0 %v153, 127
      %v155 = vpop.permute.xlu0 %154
      %156 = vrot.lane.b32.xlu0 %v151, 127
      %v157 = vpop.permute.xlu0 %156
      %vm158 = vcmask 1039360
      %v159 = vsel %vm158, %v155, %v157
      %v161 = vcombine.high %v151, %v151
      %162 = vrot.lane.b32.xlu0 %v151, 126
      %v163 = vpop.permute.xlu0 %162
      %164 = vrot.lane.b32.xlu0 %v161, 126
      %v165 = vpop.permute.xlu0 %164
      %vm166 = vcmask 1031168
      %v167 = vsel %vm166, %v163, %v165
      %vm169 = vcmask 1043456
      %v170 = vsel %vm169, %v151, %v159
      %v171 = vsel %vm169, %v167, 1.0
      %v172 = vlaneseq
      %v173 = vand.u32 %v172, 127
      %s174 = smul.u32 %s17, 128
      %s175 = ssub.s32 14, %s174
      %v176 = vstv %s175
      %vm177 = vcmp.lt.s32.totalorder %v173, %v176
      %v178 = vsel %vm177, %v170, 0.0
      %v179 = vsel %vm177, %v171, 0.0
      %180 = vmatprep.subr.mxu0 0.0
      %181 = vmatpush1.xpose.msra.mxu0 0.0
      %182 = vmatprep.subr.mxu0 0.0
      %183 = vmatpush1.xpose.msra.mxu0 0.0
      %184 = vmatprep.subr.mxu0 0.0
      %185 = vmatpush1.xpose.msra.mxu0 0.0
      %186 = vmatprep.subr.mxu0 0.0
      %187 = vmatpush1.xpose.msra.mxu0 0.0
      %188 = vmatprep.subr.mxu0 0.0
      %189 = vmatpush1.xpose.msra.mxu0 0.0
      %190 = vmatprep.subr.mxu0 0.0
      %191 = vmatpush1.xpose.msra.mxu0 0.0
      %192 = vmatprep.subr.mxu0 0.0
      %193 = vmatpush1.xpose.msra.mxu0 0.0
      %194 = vmatprep.subr.mxu0 0.0
      %195 = vmatpush1.xpose.msra.mxu0 0.0
      %196 = vmatprep.subr.mxu0 0.0
      %197 = vmatpush1.xpose.msra.mxu0 0.0
      %198 = vmatprep.subr.mxu0 0.0
      %199 = vmatpush1.xpose.msra.mxu0 0.0
      %200 = vmatprep.subr.mxu0 0.0
      %201 = vmatpush1.xpose.msra.mxu0 0.0
      %202 = vmatprep.subr.mxu0 0.0
      %203 = vmatpush1.xpose.msra.mxu0 0.0
      %204 = vmatprep.subr.mxu0 0.0
      %205 = vmatpush1.xpose.msra.mxu0 0.0
      %206 = vmatprep.subr.mxu0 0.0
      %207 = vmatpush1.xpose.msra.mxu0 0.0
      %208 = vmatprep.subr.mxu0 0.0
      %209 = vmatpush1.xpose.msra.mxu0 %v179
      %210 = vmatprep.subr.mxu0 0.0
      %211 = vmatpush1.xpose.msra.mxu0 %v178
      %212 = vmatprep.subr.mxu0 0.0
      %213 = vmatpush2.xpose.msra.mxu0 0.0
      %214 = vmatprep.subr.mxu0 0.0
      %215 = vmatpush2.xpose.msra.mxu0 0.0
      %216 = vmatprep.subr.mxu0 0.0
      %217 = vmatpush2.xpose.msra.mxu0 0.0
      %218 = vmatprep.subr.mxu0 0.0
      %219 = vmatpush2.xpose.msra.mxu0 0.0
      %220 = vmatprep.subr.mxu0 0.0
      %221 = vmatpush2.xpose.msra.mxu0 0.0
      %222 = vmatprep.subr.mxu0 0.0
      %223 = vmatpush2.xpose.msra.mxu0 0.0
      %224 = vmatprep.subr.mxu0 0.0
      %225 = vmatpush2.xpose.msra.mxu0 0.0
      %226 = vmatprep.subr.mxu0 0.0
      %227 = vmatpush2.xpose.msra.mxu0 0.0
      %228 = vmatprep.subr.mxu0 0.0
      %229 = vmatpush2.xpose.msra.mxu0 0.0
      %230 = vmatprep.subr.mxu0 0.0
      %231 = vmatpush2.xpose.msra.mxu0 0.0
      %232 = vmatprep.subr.mxu0 0.0
      %233 = vmatpush2.xpose.msra.mxu0 0.0
      %234 = vmatprep.subr.mxu0 0.0
      %235 = vmatpush2.xpose.msra.mxu0 0.0
      %236 = vmatprep.subr.mxu0 0.0
      %237 = vmatpush2.xpose.msra.mxu0 0.0
      %238 = vmatprep.subr.mxu0 0.0
      %239 = vmatpush2.xpose.msra.mxu0 0.0
      %240 = vmatprep.subr.mxu0 0.0
      %241 = vmatpush2.xpose.msra.mxu0 0.0
      %242 = vmatprep.subr.mxu0 0.0
      %243 = vmatpush2.xpose.msra.mxu0 0.0
      %244 = vmatprep.mubr.f32.mxu0 0.0
      %245 = vmatmul.mubr.f32.gmra.mxu0 %v178
      %v246 = vpop.f32.mrf.mxu0
      %v247 = vadd.f32 0.0, %v246
      %v248 = vpop.f32.mrf.mxu0
      %249 = vmatprep.mubr.f32.mxu0 0.0
      %250 = vmatmul.mubr.f32.gmra.mxu0 %v179
      %v251 = vpop.f32.mrf.mxu0
      %v252 = vadd.f32 0.0, %v251
      %v253 = vpop.f32.mrf.mxu0
      %254 = vdwg.mxu0
      %v255 = vld [vmem:[#allocation2] sm:$0xff]
      %v256 = vld [vmem:[#allocation2 + $0x8] sm:$0x1f]
      %v257 = vadd.f32 %v255, %v247
      %v258 = vadd.f32 %v256, %v252
      %vm259 = vcmask 105472
      %260 = vst.msk [vmem:[#allocation2] sm:$0xff] %vm259, %v257
      %vm261 = vcmask 102400
      %262 = vst.msk [vmem:[#allocation2 + $0x8] sm:$0x1f] %vm261, %v258
      // Predicated region
      $region29: #{basic_block_forward.2} parent=23 // pred_check
        %p263 = pneg %p143
      $region30: #{basic_block_forward.2} parent=23 // pred_check_branch
        %265 = sbr.rel (%p263) target = $region32
      $region31: #{basic_block_forward.2} parent=23 // pred_region
        %v266 = vld [vmem:[#allocation2] sm:$0xff]
        %v267 = vld [vmem:[#allocation2 + $0x8] sm:$0x1f]
        %268 = vst.msk [vmem:[%s142] sm:$0xff] %vm259, %v266
        %269 = vst.msk [vmem:[%s142 + $0x8] sm:$0x1f] %vm261, %v267
      $region32: #{basic_block_forward.2} parent=23 // pred_fallthru
        _
      %p270 = scmp.lt.s32.totalorder %s16, 1
      %s271 = scalar_select %p270, %s16, 1
      %s272 = smul.addr %s271, 2
      %s273 = smul.addr %s272, 8
      %s274 = scalar_lea.vmem %s1, %s273
      // Predicated region
      $region33: #{basic_block_forward.2} parent=23 // pred_check
        %p275 = pneg %p70
      $region34: #{basic_block_forward.2} parent=23 // pred_check_branch
        %277 = sbr.rel (%p275) target = $region36
      $region35: #{basic_block_forward.2} parent=23 // pred_region
        _
      $region36: #{basic_block_forward.2} parent=23 // pred_fallthru
        _
    $region24: #{basic_block_forward.2} parent=5 // pred_fallthru
      _
    %p278 = scmp.le.s32.totalorder 2, %s7
    // Predicated region
    $region37: #{basic_block_forward.2} parent=5 // pred_check
      %p279 = pneg %p278
    $region38: #{basic_block_forward.2} parent=5 // pred_check_branch
      %281 = sbr.rel (%p279) target = $region40
    $region39: #{basic_block_forward.2} parent=5 // pred_region
      %s282 = ssub.s32 %s7, 2
      // Predicated region
      $region41: #{basic_block_forward.2} parent=39 // pred_check
        %p283 = pneg %p76
      $region42: #{basic_block_forward.2} parent=39 // pred_check_branch
        %285 = sbr.rel (%p283) target = $region44
      $region43: #{basic_block_forward.2} parent=39 // pred_region
        %p286 = scmp.lt.s32.totalorder %s18, 1
        %s287 = scalar_select %p286, %s18, 1
        %s288 = smul.addr %s287, 2
        %s289 = smul.addr %s288, 8
        %s290 = scalar_lea.vmem %s1, %s289
      $region44: #{basic_block_forward.2} parent=39 // pred_fallthru
        _
    $region40: #{basic_block_forward.2} parent=5 // pred_fallthru
      _
  $region6: #{basic_block_forward.2} parent=0 // loop_footer
    %s11 = sadd.s32 1, %s7
  $region7: #{basic_block_forward.2} parent=0 // loop_footer_branch
    %6 = sbr.rel target = $region3
  $region8: #{basic_block_forward.2} parent=0 // loop_exit
    _

// kernel: basic_block_forward.3
$region0: #{basic_block_forward.3}
  #allocation0 [shape = 'u32[]', space=smem, size = 0x4, offset = 0x4, fixed_abs, tag = 'smem constant byte address 0x4 - core index']
  #allocation1 [shape = 'u32[144,128]{1,0:T(1,128)}', space=vmem, size = 0x12000, scoped, tag = 'internal scratch']
  %s0 = inlined_call_operand.vmem [shape: f32[8,12], index: 0, kind: input, shape index: {}]
  %s1 = inlined_call_operand.vmem [shape: f32[8,2], index: 1, kind: input, shape index: {}]
  %s2 = inlined_call_operand.vmem [shape: f32[2,1,4,256], index: 2, kind: input, shape index: {}]
  %s3 = inlined_call_operand.hbm [shape: f32[2,8,128], index: 3, kind: output, shape index: {}]
  %s4 = sld [smem:[#allocation0]]
  $region45: #{basic_block_forward.3} parent=0
    _
  %s6 = ssub.s32 1, %s4
  %s7 = scalar_select 0, %s6, %s4
  $region1: #{basic_block_forward.3} parent=0
    #allocation2 [shape = 'u8[8192]{0}', space=vmem, size = 0x2000, scoped, tag = 'output window, operand 0']
    #allocation3 [shape = 's32[2]{0}', space=sflag, size = 0x8, scoped, tag = 'scoped memory for basic_block_forward.3']
    %8 = vsyncpa [#allocation3], 0
    %s9 = scalar_lea.sflag [#allocation3], 1
    %10 = vsyncpa %s9, 0
    loop: start=0, step=1, limit=4
    $region2: #{basic_block_forward.3} parent=1 // loop_pre_header
      _
    $region3: #{basic_block_forward.3} parent=1 // loop_header
      %s12 = sphi 0, %s16
      %p13 = scmp.ge.s32.totalorder %s12, 4
      %s19 = sphi 0, %s31
      %s20 = sphi 0, %s27
      %s21 = sphi 0, %s19
      %s22 = sphi 0, %s20
      %s23 = sphi 0, %s21
      %s24 = sphi 0, %s22
      %s32 = sphi 0, %s32
      %s34 = sphi 0, %s32
      %s35 = sphi 0, %s34
      %s49 = sphi 0, %s35
      %s53 = sphi 0, %s53
      %s55 = sphi 0, %s53
      %s56 = sphi 0, %s55
      %s70 = sphi 0, %s56
      %s78 = sphi 0, %s80
      %s81 = sphi 0, %s78
      %s82 = sphi 0, %s81
      %s98 = sphi 0, %s82
      %s106 = sphi 0, %s108
      %s109 = sphi 0, %s106
      %s110 = sphi 0, %s109
      %s126 = sphi 0, %s110
    $region4: #{basic_block_forward.3} parent=1 // loop_header_branch
      %15 = sbr.rel (%p13) target = $region8
    $region5: #{basic_block_forward.3} parent=1 // loop_body
      %s17 = ssub.s32 %s12, 1
      %s18 = ssub.s32 %s12, 2
      %s25 = sadd.s32 1, %s20
      %p26 = scmp.ge.s32.totalorder %s25, 1
      %s27 = scalar_select %p26, 0, %s25
      %s28 = sadd.s32 1, %s19
      %s29 = scalar_select %p26, %s28, %s19
      %p30 = scmp.ge.s32.totalorder %s29, 2
      %s31 = scalar_select %p30, 0, %s29
      %s33 = sadd.s32 %s32, 1
      %p36 = scmp.eq.s32.totalorder %s12, 1
      %p37 = scmp.ne.s32.totalorder %s32, %s34
      %p38 = scmp.eq.s32.totalorder %s12, 0
      %p39 = por %p37, %p38
      %p40 = scmp.ne.s32.totalorder %s32, %s34
      %p41 = scmp.eq.s32.totalorder %s17, 1
      %p42 = por %p40, %p41
      %p43 = scmp.ne.s32.totalorder %s34, %s35
      %p44 = scmp.eq.s32.totalorder %s17, 0
      %p45 = por %p43, %p44
      %p46 = scmp.ne.s32.totalorder %s34, %s35
      %p47 = scmp.eq.s32.totalorder %s18, 1
      %p48 = por %p46, %p47
      %p50 = scmp.ne.s32.totalorder %s35, %s49
      %p51 = scmp.eq.s32.totalorder %s18, 0
      %p52 = por %p50, %p51
      %s54 = sadd.s32 %s53, 1
      %p57 = scmp.eq.s32.totalorder %s12, 1
      %p58 = scmp.ne.s32.totalorder %s53, %s55
      %p59 = scmp.eq.s32.totalorder %s12, 0
      %p60 = por %p58, %p59
      %p61 = scmp.ne.s32.totalorder %s53, %s55
      %p62 = scmp.eq.s32.totalorder %s17, 1
      %p63 = por %p61, %p62
      %p64 = scmp.ne.s32.totalorder %s55, %s56
      %p65 = scmp.eq.s32.totalorder %s17, 0
      %p66 = por %p64, %p65
      %p67 = scmp.ne.s32.totalorder %s55, %s56
      %p68 = scmp.eq.s32.totalorder %s18, 1
      %p69 = por %p67, %p68
      %p71 = scmp.ne.s32.totalorder %s56, %s70
      %p72 = scmp.eq.s32.totalorder %s18, 0
      %p73 = por %p71, %p72
      %s74 = ssub.s32 %s19, %s31
      %s75 = ssub.s32 %s20, %s27
      %s76 = sor.u32 %s74, %s75
      %p77 = scmp.eq.s32.totalorder %s76, 0
      %s79 = sadd.s32 %s78, 1
      %s80 = scalar_select %p77, %s78, %s79
      %p83 = pneg %p77
      %p84 = scmp.eq.s32.totalorder %s12, 1
      %p85 = por %p83, %p84
      %p86 = scmp.ne.s32.totalorder %s78, %s81
      %p87 = scmp.eq.s32.totalorder %s12, 0
      %p88 = por %p86, %p87
      %p89 = scmp.ne.s32.totalorder %s78, %s81
      %p90 = scmp.eq.s32.totalorder %s17, 1
      %p91 = por %p89, %p90
      %p92 = scmp.ne.s32.totalorder %s81, %s82
      %p93 = scmp.eq.s32.totalorder %s17, 0
      %p94 = por %p92, %p93
      %p95 = scmp.ne.s32.totalorder %s81, %s82
      %p96 = scmp.eq.s32.totalorder %s18, 1
      %p97 = por %p95, %p96
      %p99 = scmp.ne.s32.totalorder %s82, %s98
      %p100 = scmp.eq.s32.totalorder %s18, 0
      %p101 = por %p99, %p100
      %s102 = ssub.s32 %s19, %s31
      %s103 = ssub.s32 %s20, %s27
      %s104 = sor.u32 %s102, %s103
      %p105 = scmp.eq.s32.totalorder %s104, 0
      %s107 = sadd.s32 %s106, 1
      %s108 = scalar_select %p105, %s106, %s107
      %p111 = pneg %p105
      %p112 = scmp.eq.s32.totalorder %s12, 1
      %p113 = por %p111, %p112
      %p114 = scmp.ne.s32.totalorder %s106, %s109
      %p115 = scmp.eq.s32.totalorder %s12, 0
      %p116 = por %p114, %p115
      %p117 = scmp.ne.s32.totalorder %s106, %s109
      %p118 = scmp.eq.s32.totalorder %s17, 1
      %p119 = por %p117, %p118
      %p120 = scmp.ne.s32.totalorder %s109, %s110
      %p121 = scmp.eq.s32.totalorder %s17, 0
      %p122 = por %p120, %p121
      %p123 = scmp.ne.s32.totalorder %s109, %s110
      %p124 = scmp.eq.s32.totalorder %s18, 1
      %p125 = por %p123, %p124
      %p127 = scmp.ne.s32.totalorder %s110, %s126
      %p128 = scmp.eq.s32.totalorder %s18, 0
      %p129 = por %p127, %p128
      %p130 = scmp.le.s32.totalorder 1, %s12
      %p131 = scmp.lt.s32.totalorder %s12, 3
      %p132 = pnand %p130, %p131
      %p133 = pneg %p132
      // Predicated region
      $region9: #{basic_block_forward.3} parent=5 // pred_check
        _
      $region10: #{basic_block_forward.3} parent=5 // pred_check_branch
        %135 = sbr.rel (%p132) target = $region12
      $region11: #{basic_block_forward.3} parent=5 // pred_region
        %s136 = ssub.s32 %s12, 1
        // Predicated region
        $region13: #{basic_block_forward.3} parent=11 // pred_check
          %p137 = pneg %p45
        $region14: #{basic_block_forward.3} parent=11 // pred_check_branch
          %139 = sbr.rel (%p137) target = $region16
        $region15: #{basic_block_forward.3} parent=11 // pred_region
          _
        $region16: #{basic_block_forward.3} parent=11 // pred_fallthru
          _
        // Predicated region
        $region17: #{basic_block_forward.3} parent=11 // pred_check
          %p140 = pneg %p66
        $region18: #{basic_block_forward.3} parent=11 // pred_check_branch
          %142 = sbr.rel (%p140) target = $region20
        $region19: #{basic_block_forward.3} parent=11 // pred_region
          _
        $region20: #{basic_block_forward.3} parent=11 // pred_fallthru
          _
      $region12: #{basic_block_forward.3} parent=5 // pred_fallthru
        _
      %p143 = scmp.lt.s32.totalorder %s12, 2
      // Predicated region
      $region21: #{basic_block_forward.3} parent=5 // pred_check
        %p144 = pneg %p143
      $region22: #{basic_block_forward.3} parent=5 // pred_check_branch
        %146 = sbr.rel (%p144) target = $region24
      $region23: #{basic_block_forward.3} parent=5 // pred_region
        // Predicated region
        $region25: #{basic_block_forward.3} parent=23 // pred_check
          %p147 = pneg %p88
        $region26: #{basic_block_forward.3} parent=23 // pred_check_branch
          %149 = sbr.rel (%p147) target = $region28
        $region27: #{basic_block_forward.3} parent=23 // pred_region
          %p150 = scmp.lt.s32.totalorder %s19, 1
          %s151 = scalar_select %p150, %s19, 1
          %p152 = scmp.lt.s32.totalorder %s20, 0
          %s153 = scalar_select %p152, %s20, 0
          %s154 = smul.addr %s153, 2
          %s155 = smul.addr %s151, 2
          %s156 = sadd.s32 %s154, %s155
          %s157 = smul.addr %s156, 4
          %s158 = scalar_lea.vmem %s2, %s157
        $region28: #{basic_block_forward.3} parent=23 // pred_fallthru
          _
      $region24: #{basic_block_forward.3} parent=5 // pred_fallthru
        _
      %p159 = scmp.le.s32.totalorder 1, %s12
      %p160 = scmp.lt.s32.totalorder %s12, 3
      %p161 = pnand %p159, %p160
      %p162 = pneg %p161
      // Predicated region
      $region29: #{basic_block_forward.3} parent=5 // pred_check
        _
      $region30: #{basic_block_forward.3} parent=5 // pred_check_branch
        %164 = sbr.rel (%p161) target = $region32
      $region31: #{basic_block_forward.3} parent=5 // pred_region
        %s165 = ssub.s32 %s12, 1
        %p166 = pneg %p45
        %p167 = pneg %p42
        %p168 = pneg %p66
        %p169 = pneg %p63
        %p170 = scmp.lt.s32.totalorder %s21, 1
        %s171 = scalar_select %p170, %s21, 1
        %p172 = scmp.lt.s32.totalorder %s22, 0
        %s173 = scalar_select %p172, %s22, 0
        %s174 = smul.addr %s173, 2
        %s175 = smul.addr %s171, 2
        %s176 = sadd.s32 %s174, %s175
        %s177 = smul.addr %s176, 4
        %s178 = scalar_lea.vmem %s2, %s177
        %p179 = pneg %p94
        %p180 = pneg %p91
        %p181 = pneg %p122
        %p182 = pneg %p119
        %s183 = sand.u32 %s109, 1
        %s184 = scalar_lea.sflag [#allocation3], %s183
        %s185 = sand.u32 %s109, 1
        %s186 = smul.addr %s185, 8
        %s187 = scalar_lea.vmem [#allocation2], %s186
        %p188 = scmp.lt.s32.totalorder %s21, 1
        %s189 = scalar_select %p188, %s21, 1
        %p190 = scmp.lt.s32.totalorder %s22, 0
        %s191 = scalar_select %p190, %s22, 0
        %s192 = smul.addr %s191, 2
        %s193 = smul.addr %s189, 2
        %s194 = sadd.s32 %s192, %s193
        %s195 = smul.addr %s194, 4
        %s196 = scalar_lea.vmem %s2, %s195
        %v197 = vld [vmem:[%s196] sm:$0xff]
        %v199 = vcombine.low %v197, %v197
        %200 = vrot.lane.b32.xlu0 %v199, 127
        %v201 = vpop.permute.xlu0 %200
        %202 = vrot.lane.b32.xlu0 %v197, 127
        %v203 = vpop.permute.xlu0 %202
        %vm204 = vcmask 1039360
        %v205 = vsel %vm204, %v201, %v203
        %v207 = vcombine.high %v197, %v197
        %208 = vrot.lane.b32.xlu0 %v197, 126
        %v209 = vpop.permute.xlu0 %208
        %210 = vrot.lane.b32.xlu0 %v207, 126
        %v211 = vpop.permute.xlu0 %210
        %vm212 = vcmask 1031168
        %v213 = vsel %vm212, %v209, %v211
        %vm214 = vcmask 1043456
        %v215 = vsel %vm214, %v197, %v205
        %v216 = vld [vmem:[%s0] sm:$0xff]
        %vm217 = vcmask 97280
        %v219 = vsel %vm217, %v216, 0
        %v221 = vsel %vm214, %v213, 0
        %223 = vmatprep.subr.mxu0 0.0
        %224 = vmatpush1.msra.mxu0 0.0
        %225 = vmatprep.subr.mxu0 0.0
        %226 = vmatpush1.msra.mxu0 0.0
        %227 = vmatprep.subr.mxu0 0.0
        %228 = vmatpush1.msra.mxu0 0.0
        %229 = vmatprep.subr.mxu0 0.0
        %230 = vmatpush1.msra.mxu0 0.0
        %231 = vmatprep.subr.mxu0 0.0
        %232 = vmatpush1.msra.mxu0 0.0
        %233 = vmatprep.subr.mxu0 0.0
        %234 = vmatpush1.msra.mxu0 0.0
        %235 = vmatprep.subr.mxu0 0.0
        %236 = vmatpush1.msra.mxu0 0.0
        %237 = vmatprep.subr.mxu0 0.0
        %238 = vmatpush1.msra.mxu0 0.0
        %239 = vmatprep.subr.mxu0 0.0
        %240 = vmatpush1.msra.mxu0 0.0
        %241 = vmatprep.subr.mxu0 0.0
        %242 = vmatpush1.msra.mxu0 0.0
        %243 = vmatprep.subr.mxu0 0.0
        %244 = vmatpush1.msra.mxu0 0.0
        %245 = vmatprep.subr.mxu0 0.0
        %246 = vmatpush1.msra.mxu0 0.0
        %247 = vmatprep.subr.mxu0 0.0
        %248 = vmatpush1.msra.mxu0 0.0
        %249 = vmatprep.subr.mxu0 0.0
        %250 = vmatpush1.msra.mxu0 0.0
        %251 = vmatprep.subr.mxu0 0.0
        %252 = vmatpush1.msra.mxu0 %v221
        %253 = vmatprep.subr.mxu0 0.0
        %254 = vmatpush1.msra.mxu0 %v215
        %255 = vmatprep.subr.mxu0 0.0
        %256 = vmatpush2.msra.mxu0 0.0
        %257 = vmatprep.subr.mxu0 0.0
        %258 = vmatpush2.msra.mxu0 0.0
        %259 = vmatprep.subr.mxu0 0.0
        %260 = vmatpush2.msra.mxu0 0.0
        %261 = vmatprep.subr.mxu0 0.0
        %262 = vmatpush2.msra.mxu0 0.0
        %263 = vmatprep.subr.mxu0 0.0
        %264 = vmatpush2.msra.mxu0 0.0
        %265 = vmatprep.subr.mxu0 0.0
        %266 = vmatpush2.msra.mxu0 0.0
        %267 = vmatprep.subr.mxu0 0.0
        %268 = vmatpush2.msra.mxu0 0.0
        %269 = vmatprep.subr.mxu0 0.0
        %270 = vmatpush2.msra.mxu0 0.0
        %271 = vmatprep.subr.mxu0 0.0
        %272 = vmatpush2.msra.mxu0 0.0
        %273 = vmatprep.subr.mxu0 0.0
        %274 = vmatpush2.msra.mxu0 0.0
        %275 = vmatprep.subr.mxu0 0.0
        %276 = vmatpush2.msra.mxu0 0.0
        %277 = vmatprep.subr.mxu0 0.0
        %278 = vmatpush2.msra.mxu0 0.0
        %279 = vmatprep.subr.mxu0 0.0
        %280 = vmatpush2.msra.mxu0 0.0
        %281 = vmatprep.subr.mxu0 0.0
        %282 = vmatpush2.msra.mxu0 0.0
        %283 = vmatprep.subr.mxu0 0.0
        %284 = vmatpush2.msra.mxu0 0.0
        %285 = vmatprep.subr.mxu0 0.0
        %286 = vmatpush2.msra.mxu0 0.0
        %287 = vmatprep.mubr.f32.mxu0 0.0
        %288 = vmatmul.mubr.f32.gmra.mxu0 %v219
        %v289 = vpop.f32.mrf.mxu0
        %v290 = vadd.f32 0.0, %v289
        %v291 = vpop.f32.mrf.mxu0
        %292 = vdwg.mxu0
        %v293 = vld [vmem:[%s1] sm:$0xff]
        %295 = vset.pattern.permute.xlu0 0
        %296 = vperm.xlu0 %295, %v293
        %v297 = vpop.permute.xlu0 %296
        %v299 = vmul.f32 %v290, %v297
        %300 = vset.pattern.permute.xlu0 1
        %301 = vperm.xlu0 %300, %v293
        %v302 = vpop.permute.xlu0 %301
        %v304 = vadd.f32 %v299, %v302
        %v305 = vmax.f32 %v304, 0.0
        %306 = vst [vmem:[%s187] sm:$0xff] %v305
        %s307 = sand.u32 %s109, 1
        %s308 = scalar_lea.sflag [#allocation3], %s307
        %s309 = sand.u32 %s109, 1
        %s310 = smul.addr %s309, 8
        %s311 = scalar_lea.vmem [#allocation2], %s310
        // Predicated region
        $region33: #{basic_block_forward.3} parent=31 // pred_check
          %p312 = pneg %p119
        $region34: #{basic_block_forward.3} parent=31 // pred_check_branch
          %314 = sbr.rel (%p312) target = $region36
        $region35: #{basic_block_forward.3} parent=31 // pred_region
          %s316 = ssub.s32 128, 128
          %317 = vsyncadd %s308, %s316
          %s318 = sadd.s32 %s22, %s21
          %s319 = smul.addr %s318, 128
          %s320 = scalar_lea.hbm %s3, %s319
          %s322 = sshll.u32 %s311, 4
          %s323 = int_to_ptr.vmem [resolvable:$true] %s322
          %325 = dma.vmem_to_hbm [thread:$0]  %s323, 128, %s320, %s308
        $region36: #{basic_block_forward.3} parent=31 // pred_fallthru
          _
      $region32: #{basic_block_forward.3} parent=5 // pred_fallthru
        _
      %p326 = scmp.le.s32.totalorder 2, %s12
      // Predicated region
      $region37: #{basic_block_forward.3} parent=5 // pred_check
        %p327 = pneg %p326
      $region38: #{basic_block_forward.3} parent=5 // pred_check_branch
        %329 = sbr.rel (%p327) target = $region40
      $region39: #{basic_block_forward.3} parent=5 // pred_region
        %s330 = ssub.s32 %s12, 2
        // Predicated region
        $region41: #{basic_block_forward.3} parent=39 // pred_check
          %p331 = pneg %p125
        $region42: #{basic_block_forward.3} parent=39 // pred_check_branch
          %333 = sbr.rel (%p331) target = $region44
        $region43: #{basic_block_forward.3} parent=39 // pred_region
          %s334 = sand.u32 %s110, 1
          %s335 = scalar_lea.sflag [#allocation3], %s334
          %s336 = sand.u32 %s110, 1
          %s337 = smul.addr %s336, 8
          %s338 = scalar_lea.vmem [#allocation2], %s337
          %339 = dma.done %s335, 128
        $region44: #{basic_block_forward.3} parent=39 // pred_fallthru
          _
      $region40: #{basic_block_forward.3} parent=5 // pred_fallthru
        _
    $region6: #{basic_block_forward.3} parent=1 // loop_footer
      %s16 = sadd.s32 1, %s12
    $region7: #{basic_block_forward.3} parent=1 // loop_footer_branch
      %11 = sbr.rel target = $region3
    $region8: #{basic_block_forward.3} parent=1 // loop_exit
      _
    %340 = vsyncpa [#allocation3], 1
    %s341 = scalar_lea.sflag [#allocation3], 1
    %342 = vsyncpa %s341, 1

</llo_original>
